<compile_context>
chip_gen: v7x
topology: tpu7x:2x2x1
jax: 0.10.0
libtpu: 0.0.40
codegen_flags: <defaults>
</compile_context>

<pallas_src>
import functools

import jax
import jax.numpy as jnp
from jax import lax
from jax.experimental import pallas as pl
from jax.experimental.pallas import tpu as pltpu


def _round_up(x, m):
    return ((x + m - 1) // m) * m


def _largest_divisor_leq(n, cap):
    cap = max(1, min(n, cap))
    for d in range(cap, 0, -1):
        if n % d == 0:
            return d
    return 1


# ----------------------------------------------------------------------------
# Kernel: streamed GRU recurrence + o2p + reparameterization.
# Grid = (batch_blocks, T_blocks); h persists in VMEM scratch across T blocks.
# ----------------------------------------------------------------------------
def encoder_kernel(gi_ref,      # (tT, bB, 3E)   mxu_dtype
                   whh_ref,     # (E, 3E)        mxu_dtype  (fused r|z|n)
                   bhh_ref,     # (1, 3E)        f32        ([0 | 0 | b_hn])
                   wout_ref,    # (E, 2P)        mxu_dtype  (mu | logvar)
                   bout_ref,    # (1, 2P)        f32
                   eps_ref,     # (bB, P)        f32
                   out_ref,     # (bB, OUT_LANES) f32       (mu|logvar|z|pad)
                   h_ref):      # (bB, E)        f32 scratch (persistent)
    t_idx = pl.program_id(1)
    n_t = pl.num_programs(1)
    tT = gi_ref.shape[0]
    bB, E = h_ref.shape
    P = eps_ref.shape[1]

    @pl.when(t_idx == 0)
    def _():
        h_ref[...] = jnp.zeros_like(h_ref)      # PyTorch GRU hidden=None

    # Hoist weight load / bias broadcast out of the timestep loop.
    whh = whh_ref[...]                                          # (E, 3E)
    bhh = jnp.broadcast_to(bhh_ref[...], (bB, 3 * E))           # (bB, 3E) f32

    def step(s, h):
        # One fused recurrent matmul per step (single MXU push/pop).
        gh = jnp.dot(h.astype(whh.dtype), whh,
                     preferred_element_type=jnp.float32) + bhh   # (bB, 3E)
        gi_t = gi_ref[s].astype(jnp.float32)                     # (bB, 3E)
        # gi_* already contain b_ih (+ b_hh for the r/z gates);
        # b_hn rides in gh so it stays inside r * (.).
        r = jax.nn.sigmoid(gi_t[:, 0:E] + gh[:, 0:E])
        zg = jax.nn.sigmoid(gi_t[:, E:2 * E] + gh[:, E:2 * E])
        n = jnp.tanh(gi_t[:, 2 * E:3 * E] + r * gh[:, 2 * E:3 * E])
        return n + zg * (h - n)            # == (1 - z) * n + z * h

    unroll = True if tT <= 8 else 8
    h = lax.fori_loop(0, tT, step, h_ref[...], unroll=unroll)
    h_ref[...] = h

    @pl.when(t_idx == n_t - 1)
    def _():
        # output[-1] -> o2p -> chunk -> z = mu + eps * exp(logvar / 2)
        wout = wout_ref[...]
        ps = jnp.dot(h.astype(wout.dtype), wout,
                     preferred_element_type=jnp.float32) + bout_ref[...]
        mu = ps[:, 0:P]
        lv = ps[:, P:2 * P]
        z = mu + eps_ref[...] * jnp.exp(lv * 0.5)
        packed = jnp.concatenate([mu, lv, z], axis=-1)           # (bB, 3P)
        pad = out_ref.shape[1] - 3 * P
        if pad > 0:
            packed = jnp.concatenate(
                [packed, jnp.zeros((bB, pad), jnp.float32)], axis=-1)
        out_ref[...] = packed        # single lane-dense full-width store


# ----------------------------------------------------------------------------
# Wrapper
# ----------------------------------------------------------------------------
@functools.partial(jax.jit,
                   static_argnames=("mxu_dtype", "t_block", "b_block"))
def encoder_forward(embedded, w_ih, w_hh, b_ih, b_hh, w_o, b_o, eps,
                    mxu_dtype=jnp.float32, t_block=None, b_block=None):
    """embedded: (T, B, E) f32; PyTorch-layout GRU / Linear params.
    Returns (mu, logvar, z), each (B, P) f32."""
    T, B, E = embedded.shape
    P = eps.shape[1]

    # Pad batch to a multiple of 8 sublanes (>= 8).
    B_pad = max(8, _round_up(B, 8))
    if B_pad != B:
        embedded = jnp.pad(embedded, ((0, 0), (0, B_pad - B), (0, 0)))
        eps = jnp.pad(eps, ((0, B_pad - B), (0, 0)))

    # Hoisted input projection for ALL timesteps, kept as ONE (T, B, 3E)
    # tensor (no wrapper gate slicing).  b_ih folded fully; b_hh folded for
    # the r/z gates only (b_hn must stay inside r * (.)).
    bias_fold = b_ih + jnp.concatenate(
        [b_hh[:2 * E], jnp.zeros((E,), b_hh.dtype)])
    gi = (jnp.einsum('tbe,fe->tbf', embedded, w_ih,
                     preferred_element_type=jnp.float32)
          + bias_fold).astype(mxu_dtype)                        # (T, Bp, 3E)

    # Fused recurrent weight (E, 3E) and the n-gate recurrent bias.
    whh = w_hh.T.astype(mxu_dtype)                              # (E, 3E)
    bhh = jnp.concatenate([jnp.zeros((2 * E,), jnp.float32),
                           b_hh[2 * E:].astype(jnp.float32)]).reshape(1, 3 * E)

    # o2p fused to one (E, 2P) matmul: columns 0:P = mu, P:2P = logvar.
    wout = w_o.T.astype(mxu_dtype)                              # (E, 2P)
    bout = b_o.reshape(1, 2 * P).astype(jnp.float32)

    # --- Tiling -------------------------------------------------------------
    if b_block is None:
        b_block = B_pad        # one batch block at toy sizes; set B_pad//2
                               # etc. at production batch to shard v7x TCs.
    assert b_block % 8 == 0 and B_pad % b_block == 0
    itm = jnp.dtype(mxu_dtype).itemsize
    row_bytes = b_block * 3 * E * itm
    if t_block is None:
        t_block = max(1, min((2 << 20) // max(1, row_bytes), 128))
    t_block = _largest_divisor_leq(T, t_block)

    nb = B_pad // b_block
    nt = T // t_block
    out_lanes = _round_up(3 * P, 128)

    # VMEM budget: double-buffered gi tile + resident weights/out/eps/scratch.
    gi_blk = t_block * row_bytes
    w_bytes = (E * 3 * E + E * 2 * P) * itm + (3 * E + 2 * P) * 4
    out_blk = b_block * out_lanes * 4
    eps_blk = b_block * P * 4
    scratch_b = b_block * E * 4
    vmem_limit = int(min(2 * gi_blk + w_bytes + 2 * (out_blk + eps_blk)
                         + scratch_b + (4 << 20), 100 << 20))

    cost = pl.CostEstimate(
        flops=int(2 * T * B_pad * E * 3 * E + 2 * B_pad * E * 2 * P
                  + 10 * T * B_pad * 3 * E),
        transcendentals=int(T * B_pad * 3 * E + B_pad * P),
        bytes_accessed=int(T * B_pad * 3 * E * itm
                           + (E * 3 * E + E * 2 * P) * itm
                           + (3 * E + 2 * P) * 4
                           + B_pad * P * 4 + B_pad * out_lanes * 4),
    )

    out = pl.pallas_call(
        encoder_kernel,
        out_shape=jax.ShapeDtypeStruct((B_pad, out_lanes), jnp.float32),
        grid_spec=pltpu.PrefetchScalarGridSpec(
            num_scalar_prefetch=0,
            grid=(nb, nt),
            in_specs=[
                pl.BlockSpec((t_block, b_block, 3 * E),
                             lambda b, t: (t, b, 0)),          # gi (streamed)
                pl.BlockSpec((E, 3 * E), lambda b, t: (0, 0)),  # whh
                pl.BlockSpec((1, 3 * E), lambda b, t: (0, 0)),  # bhh
                pl.BlockSpec((E, 2 * P), lambda b, t: (0, 0)),  # wout
                pl.BlockSpec((1, 2 * P), lambda b, t: (0, 0)),  # bout
                pl.BlockSpec((b_block, P), lambda b, t: (b, 0)),  # eps
            ],
            out_specs=pl.BlockSpec((b_block, out_lanes), lambda b, t: (b, 0)),
            scratch_shapes=[pltpu.VMEM((b_block, E), jnp.float32)],
        ),
        compiler_params=pltpu.CompilerParams(
            dimension_semantics=("parallel", "arbitrary"),
            vmem_limit_bytes=vmem_limit),
        cost_estimate=cost,
    )(gi, whh, bhh, wout, bout, eps)

    mu = out[:B, 0:P]
    logvar = out[:B, P:2 * P]
    z = out[:B, 2 * P:3 * P]
    return mu, logvar, z


# ----------------------------------------------------------------------------
# Pure-JAX reference (mirrors PyTorch semantics) for a sanity check.
# ----------------------------------------------------------------------------
def reference_forward(embedded, w_ih, w_hh, b_ih, b_hh, w_o, b_o, eps):
    T, B, E = embedded.shape
    P = eps.shape[1]
    h = jnp.zeros((B, E), jnp.float32)
    for t in range(T):
        x = embedded[t]
        gi = x @ w_ih.T + b_ih
        gh = h @ w_hh.T + b_hh
        r = jax.nn.sigmoid(gi[:, :E] + gh[:, :E])
        z = jax.nn.sigmoid(gi[:, E:2 * E] + gh[:, E:2 * E])
        n = jnp.tanh(gi[:, 2 * E:] + r * gh[:, 2 * E:])
        h = (1.0 - z) * n + z * h
    ps = h @ w_o.T + b_o
    mu, logvar = ps[:, :P], ps[:, P:]
    return mu, logvar, mu + eps * jnp.exp(logvar / 2.0)


# ----------------------------------------------------------------------------
# Main
# ----------------------------------------------------------------------------
if __name__ == "__main__":
    VOCAB = 20          # vocab_size (last index is padding_idx)
    EMB = 32            # emb_dim == GRU hidden size
    OUT = 16            # output_size -> o2p produces 2*OUT
    SEQ = 8             # sequence length
    BATCH = 2           # batch size

    key = jax.random.PRNGKey(0)
    keys = jax.random.split(key, 8)

    # Frozen "char_vec" embedding table.
    char_vec = jax.random.normal(keys[0], (VOCAB, EMB), jnp.float32) * 0.1

    # GRU parameters (PyTorch layout: weight_ih (3E, E), weight_hh (3E, E)).
    w_ih = jax.random.normal(keys[1], (3 * EMB, EMB), jnp.float32) * 0.1
    w_hh = jax.random.normal(keys[2], (3 * EMB, EMB), jnp.float32) * 0.1
    b_ih = jax.random.normal(keys[3], (3 * EMB,), jnp.float32) * 0.1
    b_hh = jax.random.normal(keys[4], (3 * EMB,), jnp.float32) * 0.1

    # o2p Linear: weight (2*OUT, EMB), bias (2*OUT,)
    w_o = jax.random.normal(keys[5], (2 * OUT, EMB), jnp.float32) * 0.1
    b_o = jax.random.normal(keys[6], (2 * OUT,), jnp.float32) * 0.1

    # Token input (T, B), PyTorch GRU default seq-major layout.
    tokens = jax.random.randint(keys[7], (SEQ, BATCH), 0, VOCAB, jnp.int32)

    # Reparameterization noise, generated outside the kernel for determinism.
    eps = jax.random.normal(jax.random.PRNGKey(42), (BATCH, OUT), jnp.float32)

    # Embedding lookup (gather) as plain-JAX glue.
    # TODO(synk): the embedding gather stays outside the kernel (no clean
    # Pallas gather at these shapes).
    embedded = char_vec[tokens]                      # (T, B, E) f32

    # f32 MXU path, T-grid of 4 blocks (exercises streaming + h carry).
    mu, logvar, z = encoder_forward(embedded, w_ih, w_hh, b_ih, b_hh,
                                    w_o, b_o, eps, t_block=2)
    jax.block_until_ready((mu, logvar, z))

    mu_r, logvar_r, z_r = reference_forward(embedded, w_ih, w_hh, b_ih, b_hh,
                                            w_o, b_o, eps)
    assert jnp.allclose(mu, mu_r, atol=1e-4), "mu mismatch (f32)"
    assert jnp.allclose(logvar, logvar_r, atol=1e-4), "logvar mismatch (f32)"
    assert jnp.allclose(z, z_r, atol=1e-4), "z mismatch (f32)"

    # bf16 MXU-feeding path (v6e/v7x): looser tolerance vs the f32 reference.
    mu_b, lv_b, z_b = encoder_forward(embedded, w_ih, w_hh, b_ih, b_hh,
                                      w_o, b_o, eps,
                                      mxu_dtype=jnp.bfloat16, t_block=4)
    jax.block_until_ready((mu_b, lv_b, z_b))
    assert jnp.allclose(mu_b, mu_r, atol=5e-2), "mu mismatch (bf16)"
    assert jnp.allclose(lv_b, logvar_r, atol=5e-2), "logvar mismatch (bf16)"
    assert jnp.allclose(z_b, z_r, atol=5e-2), "z mismatch (bf16)"

    print("KERNEL_OK")
</pallas_src>

<mosaic_0001>
module attributes {stable_mosaic.version = 11 : i64} {
  func.func @encoder_kernel(%arg0: i32, %arg1: i32, %arg2: memref<2x8x96xf32, #tpu.memory_space<vmem>>, %arg3: memref<32x96xf32, #tpu.memory_space<vmem>>, %arg4: memref<1x96xf32, #tpu.memory_space<vmem>>, %arg5: memref<32x32xf32, #tpu.memory_space<vmem>>, %arg6: memref<1x32xf32, #tpu.memory_space<vmem>>, %arg7: memref<8x16xf32, #tpu.memory_space<vmem>>, %arg8: memref<8x128xf32, #tpu.memory_space<vmem>>, %arg9: memref<8x32xf32, #tpu.memory_space<vmem>>) attributes {dimension_semantics = [#tpu.dimension_semantics<parallel>, #tpu.dimension_semantics<arbitrary>], iteration_bounds = array<i64: 1, 4>, scalar_prefetch = 0 : i64, scratch_operands = 1 : i64, tpu.core_type = #tpu.core_type<tc>, window_params = [{transform_indices = @transform_0, window_bounds = array<i64: 2, 8, 96>}, {pipeline_mode = #tpu.pipeline_mode<synchronous>, transform_indices = @transform_1, window_bounds = array<i64: 32, 96>}, {pipeline_mode = #tpu.pipeline_mode<synchronous>, transform_indices = @transform_2, window_bounds = array<i64: 1, 96>}, {pipeline_mode = #tpu.pipeline_mode<synchronous>, transform_indices = @transform_3, window_bounds = array<i64: 32, 32>}, {pipeline_mode = #tpu.pipeline_mode<synchronous>, transform_indices = @transform_4, window_bounds = array<i64: 1, 32>}, {transform_indices = @transform_5, window_bounds = array<i64: 8, 16>}, {transform_indices = @transform_6, window_bounds = array<i64: 8, 128>}]} {
    %c0_i32 = arith.constant 0 : i32
    %0 = arith.cmpi eq, %arg1, %c0_i32 : i32
    %1 = arith.extui %0 : i1 to i32
    %c0_i32_0 = arith.constant 0 : i32
    %2 = arith.cmpi ne, %1, %c0_i32_0 : i32
    scf.if %2 {
      %cst_19 = arith.constant 0.000000e+00 : f32
      %70 = vector.broadcast %cst_19 : f32 to vector<8x32xf32>
      %c0_20 = arith.constant 0 : index
      %c0_21 = arith.constant 0 : index
      %71 = vector.load %arg9[%c0_20, %c0_21] : memref<8x32xf32, #tpu.memory_space<vmem>>, vector<8x32xf32>
      tpu.vector_store %arg9[%c0_20, %c0_21], %70 {strides = array<i32>} : memref<8x32xf32, #tpu.memory_space<vmem>>, vector<8x32xf32>,
    } else {
    }
    %c0 = arith.constant 0 : index
    %c0_1 = arith.constant 0 : index
    %3 = vector.load %arg3[%c0, %c0_1] : memref<32x96xf32, #tpu.memory_space<vmem>>, vector<32x96xf32>
    %c0_2 = arith.constant 0 : index
    %c0_3 = arith.constant 0 : index
    %4 = vector.load %arg4[%c0_2, %c0_3] : memref<1x96xf32, #tpu.memory_space<vmem>>, vector<1x96xf32>
    %5 = vector.shape_cast %4 : vector<1x96xf32> to vector<1x96xf32>
    %6 = vector.broadcast %5 : vector<1x96xf32> to vector<8x96xf32>
    %c0_4 = arith.constant 0 : index
    %c0_5 = arith.constant 0 : index
    %7 = vector.load %arg9[%c0_4, %c0_5] : memref<8x32xf32, #tpu.memory_space<vmem>>, vector<8x32xf32>
    %c0_i32_6 = arith.constant 0 : i32
    %cst = arith.constant dense<0.000000e+00> : vector<8x96xf32>
    %8 = tpu.matmul %7, %3, %cst {dimension_numbers = #tpu.dot_dimension_numbers<[1], [0], [0], [1], [0, 0, 1, 1], [], []>} : vector<8x32xf32>, vector<32x96xf32>, vector<8x96xf32> -> vector<8x96xf32>
    %9 = arith.addf %8, %6 : vector<8x96xf32>
    %10 = arith.index_cast %c0_i32_6 : i32 to index
    %c0_7 = arith.constant 0 : index
    %c0_8 = arith.constant 0 : index
    %11 = vector.load %arg2[%10, %c0_7, %c0_8] : memref<2x8x96xf32, #tpu.memory_space<vmem>>, vector<1x8x96xf32>
    %12 = vector.shape_cast %11 : vector<1x8x96xf32> to vector<8x96xf32>
    %13 = vector.extract_strided_slice %12 {offsets = [0, 0], sizes = [8, 32], strides = [1, 1]} : vector<8x96xf32> to vector<8x32xf32>
    %14 = vector.extract_strided_slice %9 {offsets = [0, 0], sizes = [8, 32], strides = [1, 1]} : vector<8x96xf32> to vector<8x32xf32>
    %15 = arith.addf %13, %14 : vector<8x32xf32>
    %16 = arith.negf %15 : vector<8x32xf32>
    %17 = math.exp %16 : vector<8x32xf32>
    %cst_9 = arith.constant 1.000000e+00 : f32
    %18 = vector.broadcast %cst_9 : f32 to vector<8x32xf32>
    %19 = arith.addf %18, %17 : vector<8x32xf32>
    %20 = arith.divf %18, %19 : vector<8x32xf32>
    %21 = vector.extract_strided_slice %12 {offsets = [0, 32], sizes = [8, 32], strides = [1, 1]} : vector<8x96xf32> to vector<8x32xf32>
    %22 = vector.extract_strided_slice %9 {offsets = [0, 32], sizes = [8, 32], strides = [1, 1]} : vector<8x96xf32> to vector<8x32xf32>
    %23 = arith.addf %21, %22 : vector<8x32xf32>
    %24 = arith.negf %23 : vector<8x32xf32>
    %25 = math.exp %24 : vector<8x32xf32>
    %cst_10 = arith.constant 1.000000e+00 : f32
    %26 = vector.broadcast %cst_10 : f32 to vector<8x32xf32>
    %27 = arith.addf %26, %25 : vector<8x32xf32>
    %28 = arith.divf %26, %27 : vector<8x32xf32>
    %29 = vector.extract_strided_slice %12 {offsets = [0, 64], sizes = [8, 32], strides = [1, 1]} : vector<8x96xf32> to vector<8x32xf32>
    %30 = vector.extract_strided_slice %9 {offsets = [0, 64], sizes = [8, 32], strides = [1, 1]} : vector<8x96xf32> to vector<8x32xf32>
    %31 = arith.mulf %20, %30 : vector<8x32xf32>
    %32 = arith.addf %29, %31 : vector<8x32xf32>
    %33 = math.tanh %32 : vector<8x32xf32>
    %34 = arith.subf %7, %33 : vector<8x32xf32>
    %35 = arith.mulf %28, %34 : vector<8x32xf32>
    %36 = arith.addf %33, %35 : vector<8x32xf32>
    %c1_i32 = arith.constant 1 : i32
    %cst_11 = arith.constant dense<0.000000e+00> : vector<8x96xf32>
    %37 = tpu.matmul %36, %3, %cst_11 {dimension_numbers = #tpu.dot_dimension_numbers<[1], [0], [0], [1], [0, 0, 1, 1], [], []>} : vector<8x32xf32>, vector<32x96xf32>, vector<8x96xf32> -> vector<8x96xf32>
    %38 = arith.addf %37, %6 : vector<8x96xf32>
    %39 = arith.index_cast %c1_i32 : i32 to index
    %c0_12 = arith.constant 0 : index
    %c0_13 = arith.constant 0 : index
    %40 = vector.load %arg2[%39, %c0_12, %c0_13] : memref<2x8x96xf32, #tpu.memory_space<vmem>>, vector<1x8x96xf32>
    %41 = vector.shape_cast %40 : vector<1x8x96xf32> to vector<8x96xf32>
    %42 = vector.extract_strided_slice %41 {offsets = [0, 0], sizes = [8, 32], strides = [1, 1]} : vector<8x96xf32> to vector<8x32xf32>
    %43 = vector.extract_strided_slice %38 {offsets = [0, 0], sizes = [8, 32], strides = [1, 1]} : vector<8x96xf32> to vector<8x32xf32>
    %44 = arith.addf %42, %43 : vector<8x32xf32>
    %45 = arith.negf %44 : vector<8x32xf32>
    %46 = math.exp %45 : vector<8x32xf32>
    %cst_14 = arith.constant 1.000000e+00 : f32
    %47 = vector.broadcast %cst_14 : f32 to vector<8x32xf32>
    %48 = arith.addf %47, %46 : vector<8x32xf32>
    %49 = arith.divf %47, %48 : vector<8x32xf32>
    %50 = vector.extract_strided_slice %41 {offsets = [0, 32], sizes = [8, 32], strides = [1, 1]} : vector<8x96xf32> to vector<8x32xf32>
    %51 = vector.extract_strided_slice %38 {offsets = [0, 32], sizes = [8, 32], strides = [1, 1]} : vector<8x96xf32> to vector<8x32xf32>
    %52 = arith.addf %50, %51 : vector<8x32xf32>
    %53 = arith.negf %52 : vector<8x32xf32>
    %54 = math.exp %53 : vector<8x32xf32>
    %cst_15 = arith.constant 1.000000e+00 : f32
    %55 = vector.broadcast %cst_15 : f32 to vector<8x32xf32>
    %56 = arith.addf %55, %54 : vector<8x32xf32>
    %57 = arith.divf %55, %56 : vector<8x32xf32>
    %58 = vector.extract_strided_slice %41 {offsets = [0, 64], sizes = [8, 32], strides = [1, 1]} : vector<8x96xf32> to vector<8x32xf32>
    %59 = vector.extract_strided_slice %38 {offsets = [0, 64], sizes = [8, 32], strides = [1, 1]} : vector<8x96xf32> to vector<8x32xf32>
    %60 = arith.mulf %49, %59 : vector<8x32xf32>
    %61 = arith.addf %58, %60 : vector<8x32xf32>
    %62 = math.tanh %61 : vector<8x32xf32>
    %63 = arith.subf %36, %62 : vector<8x32xf32>
    %64 = arith.mulf %57, %63 : vector<8x32xf32>
    %65 = arith.addf %62, %64 : vector<8x32xf32>
    %c2_i32 = arith.constant 2 : i32
    %c0_16 = arith.constant 0 : index
    %c0_17 = arith.constant 0 : index
    %66 = vector.load %arg9[%c0_16, %c0_17] : memref<8x32xf32, #tpu.memory_space<vmem>>, vector<8x32xf32>
    tpu.vector_store %arg9[%c0_16, %c0_17], %65 {strides = array<i32>} : memref<8x32xf32, #tpu.memory_space<vmem>>, vector<8x32xf32>,
    %c3_i32 = arith.constant 3 : i32
    %67 = arith.cmpi eq, %arg1, %c3_i32 : i32
    %68 = arith.extui %67 : i1 to i32
    %c0_i32_18 = arith.constant 0 : i32
    %69 = arith.cmpi ne, %68, %c0_i32_18 : i32
    scf.if %69 {
      %c0_19 = arith.constant 0 : index
      %c0_20 = arith.constant 0 : index
      %70 = vector.load %arg5[%c0_19, %c0_20] : memref<32x32xf32, #tpu.memory_space<vmem>>, vector<32x32xf32>
      %cst_21 = arith.constant dense<0.000000e+00> : vector<8x32xf32>
      %71 = tpu.matmul %65, %70, %cst_21 {dimension_numbers = #tpu.dot_dimension_numbers<[1], [0], [0], [1], [0, 0, 1, 1], [], []>} : vector<8x32xf32>, vector<32x32xf32>, vector<8x32xf32> -> vector<8x32xf32>
      %c0_22 = arith.constant 0 : index
      %c0_23 = arith.constant 0 : index
      %72 = vector.load %arg6[%c0_22, %c0_23] : memref<1x32xf32, #tpu.memory_space<vmem>>, vector<1x32xf32>
      %73 = vector.broadcast %72 : vector<1x32xf32> to vector<8x32xf32>
      %74 = arith.addf %71, %73 : vector<8x32xf32>
      %75 = vector.extract_strided_slice %74 {offsets = [0, 0], sizes = [8, 16], strides = [1, 1]} : vector<8x32xf32> to vector<8x16xf32>
      %76 = vector.extract_strided_slice %74 {offsets = [0, 16], sizes = [8, 16], strides = [1, 1]} : vector<8x32xf32> to vector<8x16xf32>
      %c0_24 = arith.constant 0 : index
      %c0_25 = arith.constant 0 : index
      %77 = vector.load %arg7[%c0_24, %c0_25] : memref<8x16xf32, #tpu.memory_space<vmem>>, vector<8x16xf32>
      %cst_26 = arith.constant 5.000000e-01 : f32
      %78 = vector.broadcast %cst_26 : f32 to vector<8x16xf32>
      %79 = arith.mulf %76, %78 : vector<8x16xf32>
      %80 = math.exp %79 : vector<8x16xf32>
      %81 = arith.mulf %77, %80 : vector<8x16xf32>
      %82 = arith.addf %75, %81 : vector<8x16xf32>
      %83 = tpu.concatenate %75, %76, %82 in 1 : vector<8x16xf32>, vector<8x16xf32>, vector<8x16xf32> -> vector<8x48xf32>
      %cst_27 = arith.constant 0.000000e+00 : f32
      %84 = vector.broadcast %cst_27 : f32 to vector<8x80xf32>
      %85 = tpu.concatenate %83, %84 in 1 : vector<8x48xf32>, vector<8x80xf32> -> vector<8x128xf32>
      %c0_28 = arith.constant 0 : index
      %c0_29 = arith.constant 0 : index
      %86 = vector.load %arg8[%c0_28, %c0_29] : memref<8x128xf32, #tpu.memory_space<vmem>>, vector<8x128xf32>
      tpu.vector_store %arg8[%c0_28, %c0_29], %85 {strides = array<i32>} : memref<8x128xf32, #tpu.memory_space<vmem>>, vector<8x128xf32>,
    } else {
    }
    return
  }
  func.func @transform_0(%arg0: i32, %arg1: i32) -> (i32, i32, i32) {
    %c0_i32 = arith.constant 0 : i32
    %c0_i32_0 = arith.constant 0 : i32
    return %arg1, %arg0, %c0_i32 : i32, i32, i32
  }
  func.func @transform_1(%arg0: i32, %arg1: i32) -> (i32, i32) {
    %c0_i32 = arith.constant 0 : i32
    %c0_i32_0 = arith.constant 0 : i32
    %c0_i32_1 = arith.constant 0 : i32
    return %c0_i32, %c0_i32_0 : i32, i32
  }
  func.func @transform_2(%arg0: i32, %arg1: i32) -> (i32, i32) {
    %c0_i32 = arith.constant 0 : i32
    %c0_i32_0 = arith.constant 0 : i32
    %c0_i32_1 = arith.constant 0 : i32
    return %c0_i32, %c0_i32_0 : i32, i32
  }
  func.func @transform_3(%arg0: i32, %arg1: i32) -> (i32, i32) {
    %c0_i32 = arith.constant 0 : i32
    %c0_i32_0 = arith.constant 0 : i32
    %c0_i32_1 = arith.constant 0 : i32
    return %c0_i32, %c0_i32_0 : i32, i32
  }
  func.func @transform_4(%arg0: i32, %arg1: i32) -> (i32, i32) {
    %c0_i32 = arith.constant 0 : i32
    %c0_i32_0 = arith.constant 0 : i32
    %c0_i32_1 = arith.constant 0 : i32
    return %c0_i32, %c0_i32_0 : i32, i32
  }
  func.func @transform_5(%arg0: i32, %arg1: i32) -> (i32, i32) {
    %c0_i32 = arith.constant 0 : i32
    %c0_i32_0 = arith.constant 0 : i32
    return %arg0, %c0_i32 : i32, i32
  }
  func.func @transform_6(%arg0: i32, %arg1: i32) -> (i32, i32) {
    %c0_i32 = arith.constant 0 : i32
    %c0_i32_0 = arith.constant 0 : i32
    return %arg0, %c0_i32 : i32, i32
  }
}

</mosaic_0001>

<llo_original>
// kernel: encoder_forward.1
$region0: #{encoder_forward.1}
  #allocation0 [shape = 'u32[]', space=smem, size = 0x4, offset = 0x4, fixed_abs, tag = 'smem constant byte address 0x4 - core index']
  #allocation1 [shape = 'u32[144,128]{1,0:T(1,128)}', space=vmem, size = 0x12000, scoped, tag = 'internal scratch']
  #allocation2 [shape = 'f32[8,32]{1,0:T(8,128)}', space=vmem, size = 0x1000, scoped, tag = 'scratch operand']
  %s0 = inlined_call_operand.vmem [shape: f32[8,8,96], index: 0, kind: input, shape index: {}]
  %s1 = inlined_call_operand.vmem [shape: f32[32,96], index: 1, kind: input, shape index: {}]
  %s2 = inlined_call_operand.vmem [shape: f32[1,96], index: 2, kind: input, shape index: {}]
  %s3 = inlined_call_operand.vmem [shape: f32[32,32], index: 3, kind: input, shape index: {}]
  %s4 = inlined_call_operand.vmem [shape: f32[1,32], index: 4, kind: input, shape index: {}]
  %s5 = inlined_call_operand.vmem [shape: f32[8,16], index: 5, kind: input, shape index: {}]
  %s6 = inlined_call_operand.vmem [shape: f32[8,128], index: 6, kind: output, shape index: {}]
  %s7 = sld [smem:[#allocation0]]
  $region65: #{encoder_forward.1} parent=0
    _
  %s9 = ssub.s32 1, %s7
  %s10 = scalar_select 0, %s9, %s7
  loop: start=0, step=1, limit=6
  $region2: #{encoder_forward.1} parent=0 // loop_pre_header
    _
  $region3: #{encoder_forward.1} parent=0 // loop_header
    %s12 = sphi 0, %s16
    %p13 = scmp.ge.s32.totalorder %s12, 6
    %s19 = sphi 0, %s31
    %s20 = sphi 0, %s27
    %s21 = sphi 0, %s19
    %s22 = sphi 0, %s20
    %s23 = sphi 0, %s21
    %s24 = sphi 0, %s22
    %s36 = sphi 0, %s38
    %s39 = sphi 0, %s36
    %s40 = sphi 0, %s39
    %s56 = sphi 0, %s40
    %s60 = sphi 0, %s60
    %s62 = sphi 0, %s60
    %s63 = sphi 0, %s62
    %s77 = sphi 0, %s63
    %s81 = sphi 0, %s81
    %s83 = sphi 0, %s81
    %s84 = sphi 0, %s83
    %s98 = sphi 0, %s84
    %s102 = sphi 0, %s102
    %s104 = sphi 0, %s102
    %s105 = sphi 0, %s104
    %s119 = sphi 0, %s105
    %s123 = sphi 0, %s123
    %s125 = sphi 0, %s123
    %s126 = sphi 0, %s125
    %s140 = sphi 0, %s126
    %s146 = sphi 0, %s148
    %s149 = sphi 0, %s146
    %s150 = sphi 0, %s149
    %s166 = sphi 0, %s150
    %s172 = sphi 0, %s174
    %s175 = sphi 0, %s172
    %s176 = sphi 0, %s175
    %s192 = sphi 0, %s176
  $region4: #{encoder_forward.1} parent=0 // loop_header_branch
    %15 = sbr.rel (%p13) target = $region8
  $region5: #{encoder_forward.1} parent=0 // loop_body
    %s17 = ssub.s32 %s12, 1
    %s18 = ssub.s32 %s12, 2
    %s25 = sadd.s32 1, %s20
    %p26 = scmp.ge.s32.totalorder %s25, 4
    %s27 = scalar_select %p26, 0, %s25
    %s28 = sadd.s32 1, %s19
    %s29 = scalar_select %p26, %s28, %s19
    %p30 = scmp.ge.s32.totalorder %s29, 1
    %s31 = scalar_select %p30, 0, %s29
    %s32 = ssub.s32 %s20, %s27
    %s33 = ssub.s32 %s19, %s31
    %s34 = sor.u32 %s32, %s33
    %p35 = scmp.eq.s32.totalorder %s34, 0
    %s37 = sadd.s32 %s36, 1
    %s38 = scalar_select %p35, %s36, %s37
    %p41 = pneg %p35
    %p42 = scmp.eq.s32.totalorder %s12, 3
    %p43 = por %p41, %p42
    %p44 = scmp.ne.s32.totalorder %s36, %s39
    %p45 = scmp.eq.s32.totalorder %s12, 0
    %p46 = por %p44, %p45
    %p47 = scmp.ne.s32.totalorder %s36, %s39
    %p48 = scmp.eq.s32.totalorder %s17, 3
    %p49 = por %p47, %p48
    %p50 = scmp.ne.s32.totalorder %s39, %s40
    %p51 = scmp.eq.s32.totalorder %s17, 0
    %p52 = por %p50, %p51
    %p53 = scmp.ne.s32.totalorder %s39, %s40
    %p54 = scmp.eq.s32.totalorder %s18, 3
    %p55 = por %p53, %p54
    %p57 = scmp.ne.s32.totalorder %s40, %s56
    %p58 = scmp.eq.s32.totalorder %s18, 0
    %p59 = por %p57, %p58
    %s61 = sadd.s32 %s60, 1
    %p64 = scmp.eq.s32.totalorder %s12, 3
    %p65 = scmp.ne.s32.totalorder %s60, %s62
    %p66 = scmp.eq.s32.totalorder %s12, 0
    %p67 = por %p65, %p66
    %p68 = scmp.ne.s32.totalorder %s60, %s62
    %p69 = scmp.eq.s32.totalorder %s17, 3
    %p70 = por %p68, %p69
    %p71 = scmp.ne.s32.totalorder %s62, %s63
    %p72 = scmp.eq.s32.totalorder %s17, 0
    %p73 = por %p71, %p72
    %p74 = scmp.ne.s32.totalorder %s62, %s63
    %p75 = scmp.eq.s32.totalorder %s18, 3
    %p76 = por %p74, %p75
    %p78 = scmp.ne.s32.totalorder %s63, %s77
    %p79 = scmp.eq.s32.totalorder %s18, 0
    %p80 = por %p78, %p79
    %s82 = sadd.s32 %s81, 1
    %p85 = scmp.eq.s32.totalorder %s12, 3
    %p86 = scmp.ne.s32.totalorder %s81, %s83
    %p87 = scmp.eq.s32.totalorder %s12, 0
    %p88 = por %p86, %p87
    %p89 = scmp.ne.s32.totalorder %s81, %s83
    %p90 = scmp.eq.s32.totalorder %s17, 3
    %p91 = por %p89, %p90
    %p92 = scmp.ne.s32.totalorder %s83, %s84
    %p93 = scmp.eq.s32.totalorder %s17, 0
    %p94 = por %p92, %p93
    %p95 = scmp.ne.s32.totalorder %s83, %s84
    %p96 = scmp.eq.s32.totalorder %s18, 3
    %p97 = por %p95, %p96
    %p99 = scmp.ne.s32.totalorder %s84, %s98
    %p100 = scmp.eq.s32.totalorder %s18, 0
    %p101 = por %p99, %p100
    %s103 = sadd.s32 %s102, 1
    %p106 = scmp.eq.s32.totalorder %s12, 3
    %p107 = scmp.ne.s32.totalorder %s102, %s104
    %p108 = scmp.eq.s32.totalorder %s12, 0
    %p109 = por %p107, %p108
    %p110 = scmp.ne.s32.totalorder %s102, %s104
    %p111 = scmp.eq.s32.totalorder %s17, 3
    %p112 = por %p110, %p111
    %p113 = scmp.ne.s32.totalorder %s104, %s105
    %p114 = scmp.eq.s32.totalorder %s17, 0
    %p115 = por %p113, %p114
    %p116 = scmp.ne.s32.totalorder %s104, %s105
    %p117 = scmp.eq.s32.totalorder %s18, 3
    %p118 = por %p116, %p117
    %p120 = scmp.ne.s32.totalorder %s105, %s119
    %p121 = scmp.eq.s32.totalorder %s18, 0
    %p122 = por %p120, %p121
    %s124 = sadd.s32 %s123, 1
    %p127 = scmp.eq.s32.totalorder %s12, 3
    %p128 = scmp.ne.s32.totalorder %s123, %s125
    %p129 = scmp.eq.s32.totalorder %s12, 0
    %p130 = por %p128, %p129
    %p131 = scmp.ne.s32.totalorder %s123, %s125
    %p132 = scmp.eq.s32.totalorder %s17, 3
    %p133 = por %p131, %p132
    %p134 = scmp.ne.s32.totalorder %s125, %s126
    %p135 = scmp.eq.s32.totalorder %s17, 0
    %p136 = por %p134, %p135
    %p137 = scmp.ne.s32.totalorder %s125, %s126
    %p138 = scmp.eq.s32.totalorder %s18, 3
    %p139 = por %p137, %p138
    %p141 = scmp.ne.s32.totalorder %s126, %s140
    %p142 = scmp.eq.s32.totalorder %s18, 0
    %p143 = por %p141, %p142
    %s144 = ssub.s32 %s19, %s31
    %p145 = scmp.eq.s32.totalorder %s144, 0
    %s147 = sadd.s32 %s146, 1
    %s148 = scalar_select %p145, %s146, %s147
    %p151 = pneg %p145
    %p152 = scmp.eq.s32.totalorder %s12, 3
    %p153 = por %p151, %p152
    %p154 = scmp.ne.s32.totalorder %s146, %s149
    %p155 = scmp.eq.s32.totalorder %s12, 0
    %p156 = por %p154, %p155
    %p157 = scmp.ne.s32.totalorder %s146, %s149
    %p158 = scmp.eq.s32.totalorder %s17, 3
    %p159 = por %p157, %p158
    %p160 = scmp.ne.s32.totalorder %s149, %s150
    %p161 = scmp.eq.s32.totalorder %s17, 0
    %p162 = por %p160, %p161
    %p163 = scmp.ne.s32.totalorder %s149, %s150
    %p164 = scmp.eq.s32.totalorder %s18, 3
    %p165 = por %p163, %p164
    %p167 = scmp.ne.s32.totalorder %s150, %s166
    %p168 = scmp.eq.s32.totalorder %s18, 0
    %p169 = por %p167, %p168
    %s170 = ssub.s32 %s19, %s31
    %p171 = scmp.eq.s32.totalorder %s170, 0
    %s173 = sadd.s32 %s172, 1
    %s174 = scalar_select %p171, %s172, %s173
    %p177 = pneg %p171
    %p178 = scmp.eq.s32.totalorder %s12, 3
    %p179 = por %p177, %p178
    %p180 = scmp.ne.s32.totalorder %s172, %s175
    %p181 = scmp.eq.s32.totalorder %s12, 0
    %p182 = por %p180, %p181
    %p183 = scmp.ne.s32.totalorder %s172, %s175
    %p184 = scmp.eq.s32.totalorder %s17, 3
    %p185 = por %p183, %p184
    %p186 = scmp.ne.s32.totalorder %s175, %s176
    %p187 = scmp.eq.s32.totalorder %s17, 0
    %p188 = por %p186, %p187
    %p189 = scmp.ne.s32.totalorder %s175, %s176
    %p190 = scmp.eq.s32.totalorder %s18, 3
    %p191 = por %p189, %p190
    %p193 = scmp.ne.s32.totalorder %s176, %s192
    %p194 = scmp.eq.s32.totalorder %s18, 0
    %p195 = por %p193, %p194
    %p196 = scmp.le.s32.totalorder 1, %s12
    %p197 = scmp.lt.s32.totalorder %s12, 5
    %p198 = pnand %p196, %p197
    %p199 = pneg %p198
    // Predicated region
    $region9: #{encoder_forward.1} parent=5 // pred_check
      _
    $region10: #{encoder_forward.1} parent=5 // pred_check_branch
      %201 = sbr.rel (%p198) target = $region12
    $region11: #{encoder_forward.1} parent=5 // pred_region
      %s202 = ssub.s32 %s12, 1
      // Predicated region
      $region13: #{encoder_forward.1} parent=11 // pred_check
        %p203 = pneg %p73
      $region14: #{encoder_forward.1} parent=11 // pred_check_branch
        %205 = sbr.rel (%p203) target = $region16
      $region15: #{encoder_forward.1} parent=11 // pred_region
        _
      $region16: #{encoder_forward.1} parent=11 // pred_fallthru
        _
      // Predicated region
      $region17: #{encoder_forward.1} parent=11 // pred_check
        %p206 = pneg %p94
      $region18: #{encoder_forward.1} parent=11 // pred_check_branch
        %208 = sbr.rel (%p206) target = $region20
      $region19: #{encoder_forward.1} parent=11 // pred_region
        _
      $region20: #{encoder_forward.1} parent=11 // pred_fallthru
        _
      // Predicated region
      $region21: #{encoder_forward.1} parent=11 // pred_check
        %p209 = pneg %p115
      $region22: #{encoder_forward.1} parent=11 // pred_check_branch
        %211 = sbr.rel (%p209) target = $region24
      $region23: #{encoder_forward.1} parent=11 // pred_region
        _
      $region24: #{encoder_forward.1} parent=11 // pred_fallthru
        _
      // Predicated region
      $region25: #{encoder_forward.1} parent=11 // pred_check
        %p212 = pneg %p136
      $region26: #{encoder_forward.1} parent=11 // pred_check_branch
        %214 = sbr.rel (%p212) target = $region28
      $region27: #{encoder_forward.1} parent=11 // pred_region
        _
      $region28: #{encoder_forward.1} parent=11 // pred_fallthru
        _
      // Predicated region
      $region29: #{encoder_forward.1} parent=11 // pred_check
        %p215 = pneg %p162
      $region30: #{encoder_forward.1} parent=11 // pred_check_branch
        %217 = sbr.rel (%p215) target = $region32
      $region31: #{encoder_forward.1} parent=11 // pred_region
        %p218 = scmp.lt.s32.totalorder %s21, 0
        %s219 = scalar_select %p218, %s21, 0
        %s220 = smul.addr %s219, 8
        %s221 = scalar_lea.vmem %s5, %s220
      $region32: #{encoder_forward.1} parent=11 // pred_fallthru
        _
    $region12: #{encoder_forward.1} parent=5 // pred_fallthru
      _
    %p222 = scmp.lt.s32.totalorder %s12, 4
    // Predicated region
    $region33: #{encoder_forward.1} parent=5 // pred_check
      %p223 = pneg %p222
    $region34: #{encoder_forward.1} parent=5 // pred_check_branch
      %225 = sbr.rel (%p223) target = $region36
    $region35: #{encoder_forward.1} parent=5 // pred_region
      // Predicated region
      $region37: #{encoder_forward.1} parent=35 // pred_check
        %p226 = pneg %p46
      $region38: #{encoder_forward.1} parent=35 // pred_check_branch
        %228 = sbr.rel (%p226) target = $region40
      $region39: #{encoder_forward.1} parent=35 // pred_region
        %s229 = smul.u32 2, %s20
        %p230 = scmp.lt.s32.totalorder %s229, 7
        %s231 = scalar_select %p230, %s229, 7
        %p232 = scmp.lt.s32.totalorder %s19, 0
        %s233 = scalar_select %p232, %s19, 0
        %s234 = sadd.s32 %s233, %s231
        %s235 = smul.addr %s234, 8
        %s236 = scalar_lea.vmem %s0, %s235
        %s237 = smul.u32 2, %s20
      $region40: #{encoder_forward.1} parent=35 // pred_fallthru
        _
    $region36: #{encoder_forward.1} parent=5 // pred_fallthru
      _
    %p238 = scmp.le.s32.totalorder 1, %s12
    %p239 = scmp.lt.s32.totalorder %s12, 5
    %p240 = pnand %p238, %p239
    %p241 = pneg %p240
    // Predicated region
    $region41: #{encoder_forward.1} parent=5 // pred_check
      _
    $region42: #{encoder_forward.1} parent=5 // pred_check_branch
      %243 = sbr.rel (%p240) target = $region44
    $region43: #{encoder_forward.1} parent=5 // pred_region
      %s244 = ssub.s32 %s12, 1
      %s245 = smul.u32 2, %s22
      %p246 = scmp.lt.s32.totalorder %s245, 7
      %s247 = scalar_select %p246, %s245, 7
      %p248 = scmp.lt.s32.totalorder %s21, 0
      %s249 = scalar_select %p248, %s21, 0
      %s250 = sadd.s32 %s249, %s247
      %s251 = smul.addr %s250, 8
      %s252 = scalar_lea.vmem %s0, %s251
      %p253 = pneg %p52
      %p254 = pneg %p49
      %p255 = pneg %p73
      %p256 = pneg %p70
      %p257 = pneg %p94
      %p258 = pneg %p91
      %p259 = pneg %p115
      %p260 = pneg %p112
      %p261 = pneg %p136
      %p262 = pneg %p133
      %p263 = scmp.lt.s32.totalorder %s21, 0
      %s264 = scalar_select %p263, %s21, 0
      %s265 = smul.addr %s264, 8
      %s266 = scalar_lea.vmem %s5, %s265
      %p267 = pneg %p162
      %p268 = pneg %p159
      %p269 = pneg %p188
      %p270 = pneg %p185
      %p271 = scmp.lt.s32.totalorder %s21, 0
      %s272 = scalar_select %p271, %s21, 0
      %s273 = smul.addr %s272, 8
      %s274 = scalar_lea.vmem %s6, %s273
      %s275 = smul.u32 2, %s22
      %p276 = scmp.lt.s32.totalorder %s275, 7
      %s277 = scalar_select %p276, %s275, 7
      %p278 = scmp.lt.s32.totalorder %s21, 0
      %s279 = scalar_select %p278, %s21, 0
      %s280 = sadd.s32 %s279, %s277
      %s281 = smul.addr %s280, 8
      %s282 = scalar_lea.vmem %s0, %s281
      %s283 = smul.u32 2, %s22
      %p284 = scmp.lt.s32.totalorder %s21, 0
      %s285 = scalar_select %p284, %s21, 0
      %s286 = smul.addr %s285, 8
      %s287 = scalar_lea.vmem %s5, %s286
      %p288 = scmp.lt.s32.totalorder %s21, 0
      %s289 = scalar_select %p288, %s21, 0
      %s290 = smul.addr %s289, 8
      %s291 = scalar_lea.vmem %s6, %s290
      %p292 = scmp.eq.s32.totalorder %s22, 0
      // Predicated region
      $region45: #{encoder_forward.1} parent=43 // pred_check
        %p293 = pneg %p292
      $region46: #{encoder_forward.1} parent=43 // pred_check_branch
        %295 = sbr.rel (%p293) target = $region48
      $region47: #{encoder_forward.1} parent=43 // pred_region
        %vm296 = vcmask 261120
        %297 = vst.msk [vmem:[#allocation2] sm:$0xff] %vm296, 0.0
      $region48: #{encoder_forward.1} parent=43 // pred_fallthru
        _
      %v298 = vld [vmem:[%s1] sm:$0xff]
      %v299 = vld [vmem:[%s1 + $0x8] sm:$0xff]
      %v300 = vld [vmem:[%s1 + $0x10] sm:$0xff]
      %v301 = vld [vmem:[%s1 + $0x18] sm:$0xff]
      %v302 = vld [vmem:[%s2] sm:$0x1]
      %v304 = vlaneseq
      %v305 = vshrl.u32 %v304, 7
      %v306 = vsub.s32 0, %v305
      %v307 = vrot.slane %v302, %v306
      %v309 = vld [vmem:[#allocation2] sm:$0xff]
      %vm310 = vcmask 261120
      %v312 = vsel %vm310, %v309, 0
      %314 = vmatprep.subr.mxu0 0.0
      %315 = vmatpush1.msra.mxu0 %v298
      %316 = vmatprep.subr.mxu0 0.0
      %317 = vmatpush1.msra.mxu0 %v299
      %318 = vmatprep.subr.mxu0 0.0
      %319 = vmatpush1.msra.mxu0 %v300
      %320 = vmatprep.subr.mxu0 0.0
      %321 = vmatpush1.msra.mxu0 %v301
      %322 = vmatprep.subr.mxu0 0.0
      %323 = vmatpush1.msra.mxu0 0.0
      %324 = vmatprep.subr.mxu0 0.0
      %325 = vmatpush1.msra.mxu0 0.0
      %326 = vmatprep.subr.mxu0 0.0
      %327 = vmatpush1.msra.mxu0 0.0
      %328 = vmatprep.subr.mxu0 0.0
      %329 = vmatpush1.msra.mxu0 0.0
      %330 = vmatprep.subr.mxu0 0.0
      %331 = vmatpush1.msra.mxu0 0.0
      %332 = vmatprep.subr.mxu0 0.0
      %333 = vmatpush1.msra.mxu0 0.0
      %334 = vmatprep.subr.mxu0 0.0
      %335 = vmatpush1.msra.mxu0 0.0
      %336 = vmatprep.subr.mxu0 0.0
      %337 = vmatpush1.msra.mxu0 0.0
      %338 = vmatprep.subr.mxu0 0.0
      %339 = vmatpush1.msra.mxu0 0.0
      %340 = vmatprep.subr.mxu0 0.0
      %341 = vmatpush1.msra.mxu0 0.0
      %342 = vmatprep.subr.mxu0 0.0
      %343 = vmatpush1.msra.mxu0 0.0
      %344 = vmatprep.subr.mxu0 0.0
      %345 = vmatpush1.msra.mxu0 0.0
      %346 = vmatprep.subr.mxu0 0.0
      %347 = vmatpush1.msra.mxu0 0.0
      %348 = vmatprep.subr.mxu0 0.0
      %349 = vmatpush1.msra.mxu0 0.0
      %350 = vmatprep.subr.mxu0 0.0
      %351 = vmatpush1.msra.mxu0 0.0
      %352 = vmatprep.subr.mxu0 0.0
      %353 = vmatpush1.msra.mxu0 0.0
      %354 = vmatprep.subr.mxu0 0.0
      %355 = vmatpush1.msra.mxu0 0.0
      %356 = vmatprep.subr.mxu0 0.0
      %357 = vmatpush1.msra.mxu0 0.0
      %358 = vmatprep.subr.mxu0 0.0
      %359 = vmatpush1.msra.mxu0 0.0
      %360 = vmatprep.subr.mxu0 0.0
      %361 = vmatpush1.msra.mxu0 0.0
      %362 = vmatprep.subr.mxu0 0.0
      %363 = vmatpush1.msra.mxu0 0.0
      %364 = vmatprep.subr.mxu0 0.0
      %365 = vmatpush1.msra.mxu0 0.0
      %366 = vmatprep.subr.mxu0 0.0
      %367 = vmatpush1.msra.mxu0 0.0
      %368 = vmatprep.subr.mxu0 0.0
      %369 = vmatpush1.msra.mxu0 0.0
      %370 = vmatprep.subr.mxu0 0.0
      %371 = vmatpush1.msra.mxu0 0.0
      %372 = vmatprep.subr.mxu0 0.0
      %373 = vmatpush1.msra.mxu0 0.0
      %374 = vmatprep.subr.mxu0 0.0
      %375 = vmatpush1.msra.mxu0 0.0
      %376 = vmatprep.subr.mxu0 0.0
      %377 = vmatpush1.msra.mxu0 0.0
      %378 = vmatprep.mubr.f32.mxu0 0.0
      %379 = vmatmul.mubr.f32.gmra.mrb[0].mxu0 %v312
      %v380 = vpop.f32.mrb[0].mxu0
      %v381 = vadd.f32 %v307, %v380
      %v382 = vpop.f32.mrb[0].mxu0
      %383 = vdwg.mxu0
      %v384 = vld [vmem:[%s282] sm:$0xff]
      %v385 = vadd.f32 %v384, %v381
      %v386 = vxor.u32 %v385, 2147483648
      %v387 = vmul.f32 %v386, 1.442695
      %v388 = vpow.pop %v387
      %v389 = vadd.f32 %v388, 1.0
      %v390 = vrcp.pop %v389
      %v391 = vmul.f32 1.0, %v390
      %393 = vrot.lane.b32.xlu0 %v381, 64
      %v394 = vpop.permute.xlu0 %393
      %v396 = vmul.f32 %v391, %v394
      %398 = vrot.lane.b32.xlu0 %v396, 64
      %v399 = vpop.permute.xlu0 %398
      %v401 = vadd.f32 %v384, %v399
      %v402 = vtanh.pop %v401
      %404 = vrot.lane.b32.xlu0 %v402, 64
      %v405 = vpop.permute.xlu0 %404
      %v407 = vsub.f32 %v309, %v405
      %409 = vrot.lane.b32.xlu0 %v407, 32
      %v410 = vpop.permute.xlu0 %409
      %v412 = vmul.f32 %v391, %v410
      %414 = vrot.lane.b32.xlu0 %v412, 32
      %v415 = vpop.permute.xlu0 %414
      %v417 = vadd.f32 %v402, %v415
      %419 = vrot.lane.b32.xlu0 %v417, 64
      %v420 = vpop.permute.xlu0 %419
      %v421 = vsel %vm310, %v420, 0
      %423 = vmatprep.subr.mxu0 0.0
      %424 = vmatpush1.msra.mxu0 %v298
      %425 = vmatprep.subr.mxu0 0.0
      %426 = vmatpush1.msra.mxu0 %v299
      %427 = vmatprep.subr.mxu0 0.0
      %428 = vmatpush1.msra.mxu0 %v300
      %429 = vmatprep.subr.mxu0 0.0
      %430 = vmatpush1.msra.mxu0 %v301
      %431 = vmatprep.subr.mxu0 0.0
      %432 = vmatpush1.msra.mxu0 0.0
      %433 = vmatprep.subr.mxu0 0.0
      %434 = vmatpush1.msra.mxu0 0.0
      %435 = vmatprep.subr.mxu0 0.0
      %436 = vmatpush1.msra.mxu0 0.0
      %437 = vmatprep.subr.mxu0 0.0
      %438 = vmatpush1.msra.mxu0 0.0
      %439 = vmatprep.subr.mxu0 0.0
      %440 = vmatpush1.msra.mxu0 0.0
      %441 = vmatprep.subr.mxu0 0.0
      %442 = vmatpush1.msra.mxu0 0.0
      %443 = vmatprep.subr.mxu0 0.0
      %444 = vmatpush1.msra.mxu0 0.0
      %445 = vmatprep.subr.mxu0 0.0
      %446 = vmatpush1.msra.mxu0 0.0
      %447 = vmatprep.subr.mxu0 0.0
      %448 = vmatpush1.msra.mxu0 0.0
      %449 = vmatprep.subr.mxu0 0.0
      %450 = vmatpush1.msra.mxu0 0.0
      %451 = vmatprep.subr.mxu0 0.0
      %452 = vmatpush1.msra.mxu0 0.0
      %453 = vmatprep.subr.mxu0 0.0
      %454 = vmatpush1.msra.mxu0 0.0
      %455 = vmatprep.subr.mxu0 0.0
      %456 = vmatpush1.msra.mxu0 0.0
      %457 = vmatprep.subr.mxu0 0.0
      %458 = vmatpush1.msra.mxu0 0.0
      %459 = vmatprep.subr.mxu0 0.0
      %460 = vmatpush1.msra.mxu0 0.0
      %461 = vmatprep.subr.mxu0 0.0
      %462 = vmatpush1.msra.mxu0 0.0
      %463 = vmatprep.subr.mxu0 0.0
      %464 = vmatpush1.msra.mxu0 0.0
      %465 = vmatprep.subr.mxu0 0.0
      %466 = vmatpush1.msra.mxu0 0.0
      %467 = vmatprep.subr.mxu0 0.0
      %468 = vmatpush1.msra.mxu0 0.0
      %469 = vmatprep.subr.mxu0 0.0
      %470 = vmatpush1.msra.mxu0 0.0
      %471 = vmatprep.subr.mxu0 0.0
      %472 = vmatpush1.msra.mxu0 0.0
      %473 = vmatprep.subr.mxu0 0.0
      %474 = vmatpush1.msra.mxu0 0.0
      %475 = vmatprep.subr.mxu0 0.0
      %476 = vmatpush1.msra.mxu0 0.0
      %477 = vmatprep.subr.mxu0 0.0
      %478 = vmatpush1.msra.mxu0 0.0
      %479 = vmatprep.subr.mxu0 0.0
      %480 = vmatpush1.msra.mxu0 0.0
      %481 = vmatprep.subr.mxu0 0.0
      %482 = vmatpush1.msra.mxu0 0.0
      %483 = vmatprep.subr.mxu0 0.0
      %484 = vmatpush1.msra.mxu0 0.0
      %485 = vmatprep.subr.mxu0 0.0
      %486 = vmatpush1.msra.mxu0 0.0
      %487 = vmatprep.mubr.f32.mxu0 0.0
      %488 = vmatmul.mubr.f32.gmra.mrb[0].mxu0 %v421
      %v489 = vpop.f32.mrb[0].mxu0
      %v490 = vadd.f32 %v307, %v489
      %v491 = vpop.f32.mrb[0].mxu0
      %492 = vdwg.mxu0
      %s493 = scalar_lea.vmem %s282, 8
      %v494 = vld [vmem:[%s493] sm:$0xff]
      %v495 = vadd.f32 %v494, %v490
      %v496 = vxor.u32 %v495, 2147483648
      %v497 = vmul.f32 %v496, 1.442695
      %v498 = vpow.pop %v497
      %v499 = vadd.f32 %v498, 1.0
      %v500 = vrcp.pop %v499
      %v501 = vmul.f32 1.0, %v500
      %503 = vrot.lane.b32.xlu0 %v490, 64
      %v504 = vpop.permute.xlu0 %503
      %v506 = vmul.f32 %v501, %v504
      %508 = vrot.lane.b32.xlu0 %v506, 64
      %v509 = vpop.permute.xlu0 %508
      %v511 = vadd.f32 %v494, %v509
      %v512 = vtanh.pop %v511
      %v513 = vsub.f32 %v417, %v512
      %515 = vrot.lane.b32.xlu0 %v513, 96
      %v516 = vpop.permute.xlu0 %515
      %v518 = vmul.f32 %v501, %v516
      %520 = vrot.lane.b32.xlu0 %v518, 32
      %v521 = vpop.permute.xlu0 %520
      %v523 = vadd.f32 %v512, %v521
      %525 = vrot.lane.b32.xlu0 %v523, 64
      %v526 = vpop.permute.xlu0 %525
      %528 = vst.msk [vmem:[#allocation2] sm:$0xff] %vm310, %v526
      %p529 = scmp.eq.s32.totalorder %s22, 3
      // Predicated region
      $region49: #{encoder_forward.1} parent=43 // pred_check
        %p530 = pneg %p529
      $region50: #{encoder_forward.1} parent=43 // pred_check_branch
        %532 = sbr.rel (%p530) target = $region52
      $region51: #{encoder_forward.1} parent=43 // pred_region
        %v533 = vld [vmem:[%s3] sm:$0xff]
        %v534 = vld [vmem:[%s3 + $0x8] sm:$0xff]
        %v535 = vld [vmem:[%s3 + $0x10] sm:$0xff]
        %v536 = vld [vmem:[%s3 + $0x18] sm:$0xff]
        %v537 = vld [vmem:[%s4] sm:$0x1]
        %v539 = vlaneseq
        %v540 = vshrl.u32 %v539, 7
        %v541 = vsub.s32 0, %v540
        %v542 = vrot.slane %v537, %v541
        %v544 = vsel %vm310, %v526, 0
        %546 = vmatprep.subr.mxu0 0.0
        %547 = vmatpush1.msra.mxu0 %v533
        %548 = vmatprep.subr.mxu0 0.0
        %549 = vmatpush1.msra.mxu0 %v534
        %550 = vmatprep.subr.mxu0 0.0
        %551 = vmatpush1.msra.mxu0 %v535
        %552 = vmatprep.subr.mxu0 0.0
        %553 = vmatpush1.msra.mxu0 %v536
        %554 = vmatprep.subr.mxu0 0.0
        %555 = vmatpush1.msra.mxu0 0.0
        %556 = vmatprep.subr.mxu0 0.0
        %557 = vmatpush1.msra.mxu0 0.0
        %558 = vmatprep.subr.mxu0 0.0
        %559 = vmatpush1.msra.mxu0 0.0
        %560 = vmatprep.subr.mxu0 0.0
        %561 = vmatpush1.msra.mxu0 0.0
        %562 = vmatprep.subr.mxu0 0.0
        %563 = vmatpush1.msra.mxu0 0.0
        %564 = vmatprep.subr.mxu0 0.0
        %565 = vmatpush1.msra.mxu0 0.0
        %566 = vmatprep.subr.mxu0 0.0
        %567 = vmatpush1.msra.mxu0 0.0
        %568 = vmatprep.subr.mxu0 0.0
        %569 = vmatpush1.msra.mxu0 0.0
        %570 = vmatprep.subr.mxu0 0.0
        %571 = vmatpush1.msra.mxu0 0.0
        %572 = vmatprep.subr.mxu0 0.0
        %573 = vmatpush1.msra.mxu0 0.0
        %574 = vmatprep.subr.mxu0 0.0
        %575 = vmatpush1.msra.mxu0 0.0
        %576 = vmatprep.subr.mxu0 0.0
        %577 = vmatpush1.msra.mxu0 0.0
        %578 = vmatprep.subr.mxu0 0.0
        %579 = vmatpush1.msra.mxu0 0.0
        %580 = vmatprep.subr.mxu0 0.0
        %581 = vmatpush1.msra.mxu0 0.0
        %582 = vmatprep.subr.mxu0 0.0
        %583 = vmatpush1.msra.mxu0 0.0
        %584 = vmatprep.subr.mxu0 0.0
        %585 = vmatpush1.msra.mxu0 0.0
        %586 = vmatprep.subr.mxu0 0.0
        %587 = vmatpush1.msra.mxu0 0.0
        %588 = vmatprep.subr.mxu0 0.0
        %589 = vmatpush1.msra.mxu0 0.0
        %590 = vmatprep.subr.mxu0 0.0
        %591 = vmatpush1.msra.mxu0 0.0
        %592 = vmatprep.subr.mxu0 0.0
        %593 = vmatpush1.msra.mxu0 0.0
        %594 = vmatprep.subr.mxu0 0.0
        %595 = vmatpush1.msra.mxu0 0.0
        %596 = vmatprep.subr.mxu0 0.0
        %597 = vmatpush1.msra.mxu0 0.0
        %598 = vmatprep.subr.mxu0 0.0
        %599 = vmatpush1.msra.mxu0 0.0
        %600 = vmatprep.subr.mxu0 0.0
        %601 = vmatpush1.msra.mxu0 0.0
        %602 = vmatprep.subr.mxu0 0.0
        %603 = vmatpush1.msra.mxu0 0.0
        %604 = vmatprep.subr.mxu0 0.0
        %605 = vmatpush1.msra.mxu0 0.0
        %606 = vmatprep.subr.mxu0 0.0
        %607 = vmatpush1.msra.mxu0 0.0
        %608 = vmatprep.subr.mxu0 0.0
        %609 = vmatpush1.msra.mxu0 0.0
        %610 = vmatprep.mubr.f32.mxu0 0.0
        %611 = vmatmul.mubr.f32.gmra.mrb[0].mxu0 %v544
        %v612 = vpop.f32.mrb[0].mxu0
        %v613 = vadd.f32 %v542, %v612
        %v614 = vpop.f32.mrb[0].mxu0
        %615 = vdwg.mxu0
        %v616 = vld [vmem:[%s287] sm:$0xff]
        %v617 = vmul.f32 %v613, 0.5
        %v618 = vmul.f32 %v617, 1.442695
        %v619 = vpow.pop %v618
        %621 = vrot.lane.b32.xlu0 %v619, 112
        %v622 = vpop.permute.xlu0 %621
        %v624 = vmul.f32 %v616, %v622
        %v625 = vadd.f32 %v613, %v624
        %627 = vrot.lane.b32.xlu0 %v625, 32
        %v628 = vpop.permute.xlu0 %627
        %v630 = vsel %vm310, %v613, %v628
        %vm631 = vcmask 392192
        %v632 = vsel %vm631, %v630, 0.0
        %633 = vst [vmem:[%s291] sm:$0xff] %v632
      $region52: #{encoder_forward.1} parent=43 // pred_fallthru
        _
      %p634 = scmp.lt.s32.totalorder %s21, 0
      %s635 = scalar_select %p634, %s21, 0
      %s636 = smul.addr %s635, 8
      %s637 = scalar_lea.vmem %s6, %s636
      // Predicated region
      $region53: #{encoder_forward.1} parent=43 // pred_check
        %p638 = pneg %p185
      $region54: #{encoder_forward.1} parent=43 // pred_check_branch
        %640 = sbr.rel (%p638) target = $region56
      $region55: #{encoder_forward.1} parent=43 // pred_region
        _
      $region56: #{encoder_forward.1} parent=43 // pred_fallthru
        _
      // Predicated region
      $region57: #{encoder_forward.1} parent=43 // pred_check
        %p641 = pneg %p185
      $region58: #{encoder_forward.1} parent=43 // pred_check_branch
        %643 = sbr.rel (%p641) target = $region60
      $region59: #{encoder_forward.1} parent=43 // pred_region
        %p644 = scmp.lt.s32.totalorder %s21, 0
        %s645 = scalar_select %p644, %s21, 0
        %s646 = smul.addr %s645, 8
        %s647 = scalar_lea.vmem %s6, %s646
      $region60: #{encoder_forward.1} parent=43 // pred_fallthru
        _
    $region44: #{encoder_forward.1} parent=5 // pred_fallthru
      _
    %p648 = scmp.le.s32.totalorder 2, %s12
    // Predicated region
    $region61: #{encoder_forward.1} parent=5 // pred_check
      %p649 = pneg %p648
    $region62: #{encoder_forward.1} parent=5 // pred_check_branch
      %651 = sbr.rel (%p649) target = $region64
    $region63: #{encoder_forward.1} parent=5 // pred_region
      %s652 = ssub.s32 %s12, 2
    $region64: #{encoder_forward.1} parent=5 // pred_fallthru
      _
  $region6: #{encoder_forward.1} parent=0 // loop_footer
    %s16 = sadd.s32 1, %s12
  $region7: #{encoder_forward.1} parent=0 // loop_footer_branch
    %11 = sbr.rel target = $region3
  $region8: #{encoder_forward.1} parent=0 // loop_exit
    _

</llo_original>
